<compile_context>
chip_gen: v7x
topology: tpu7x:2x2x1
jax: 0.10.0
libtpu: 0.0.40
codegen_flags: <defaults>
</compile_context>

<pallas_src>
import functools

import jax
import jax.numpy as jnp
from jax.experimental import pallas as pl
from jax.experimental.pallas import tpu as pltpu

GAMMA = 2
ALPHA = 0.25            # unused in forward (kept for parity with __init__)
WM = 74.0 / 174.0
WN = 100.0 / 174.0

LANES = 128
MAX_BLOCK_ROWS = 1024   # sweep 512..2048; (1024,128) f32 = 512 KiB/input/buffer


def _round_up(x, m):
    return ((x + m - 1) // m) * m


def _focal_loss_kernel(pt_ref, tgt_ref, out_ref, *, block_rows, valid_in_last,
                       needs_mask):
    pt = pt_ref[...].astype(jnp.float32)
    tgt = tgt_ref[...].astype(jnp.float32)

    one = jnp.float32(1.0)
    # Keep two logs so non-binary (soft) targets behave exactly like the PyTorch
    # module; masked lanes are handled by a true select below (NaN-safe).
    loss = (
        -jnp.float32(WM) * (one - pt) ** GAMMA * tgt * jnp.log(pt)
        - jnp.float32(WN) * pt ** GAMMA * (one - tgt) * jnp.log(one - pt)
    )

    def _reduce(x):
        # (block_rows, 128) -> (block_rows//8, 8, 128) -> VPU add-reduce to (8, 128).
        return jnp.sum(x.reshape(block_rows // 8, 8, LANES), axis=0)

    if not needs_mask:
        out_ref[...] = _reduce(loss)
    else:
        i = pl.program_id(0)
        last = pl.num_programs(0) - 1

        @pl.when(i != last)
        def _():
            out_ref[...] = _reduce(loss)

        @pl.when(i == last)
        def _():
            # Local flat index inside this block only (no int32 overflow risk).
            row = jax.lax.broadcasted_iota(jnp.int32, loss.shape, 0)
            col = jax.lax.broadcasted_iota(jnp.int32, loss.shape, 1)
            local_flat = row * LANES + col
            masked = jnp.where(local_flat < jnp.int32(valid_in_last), loss,
                               jnp.float32(0.0))
            out_ref[...] = _reduce(masked)


def weighted_focal_loss(_input, target, *, max_block_rows=MAX_BLOCK_ROWS):
    """Mean weighted focal loss over all elements (matches weightedFL.forward)."""
    assert _input.shape == target.shape
    total = int(_input.size)

    # Lane-dense flatten in the NATIVE dtype (no wrapper-side f32 upcast copy).
    pt_flat = jnp.reshape(_input, (-1,))
    tgt_flat = jnp.reshape(target, (-1,))

    # Minimal pad only if total is not a multiple of 128 lanes (not hit by the
    # test shape). Padded lanes are excluded by the in-kernel mask.
    if total % LANES != 0:
        pad = LANES - total % LANES
        pt_flat = jnp.pad(pt_flat, (0, pad), constant_values=0.5)
        tgt_flat = jnp.pad(tgt_flat, (0, pad), constant_values=0)

    rows = pt_flat.shape[0] // LANES
    pt2d = pt_flat.reshape(rows, LANES)
    tgt2d = tgt_flat.reshape(rows, LANES)

    block_rows = min(max_block_rows, _round_up(rows, 8))
    n_blocks = pl.cdiv(rows, block_rows)
    covered = n_blocks * block_rows * LANES
    needs_mask = covered != total
    valid_in_last = total - (n_blocks - 1) * block_rows * LANES

    kernel = functools.partial(
        _focal_loss_kernel,
        block_rows=block_rows,
        valid_in_last=valid_in_last,
        needs_mask=needs_mask,
    )

    partials = pl.pallas_call(
        kernel,
        out_shape=jax.ShapeDtypeStruct((n_blocks * 8, LANES), jnp.float32),
        grid_spec=pltpu.PrefetchScalarGridSpec(
            num_scalar_prefetch=0,
            grid=(n_blocks,),
            in_specs=[
                pl.BlockSpec((block_rows, LANES), lambda i: (i, 0)),
                pl.BlockSpec((block_rows, LANES), lambda i: (i, 0)),
            ],
            out_specs=pl.BlockSpec((8, LANES), lambda i: (i, 0)),
        ),
        compiler_params=pltpu.CompilerParams(
            dimension_semantics=("parallel",),
        ),
    )(pt2d, tgt2d)

    # Tiny finishing reduction in plain JAX (keeps the grid fully parallel,
    # so both TensorCores participate on v7x).
    return jnp.sum(partials) / jnp.float32(total)


def _reference(_input, target):
    pt = _input.astype(jnp.float32)
    t = target.astype(jnp.float32)
    loss = (
        -WM * (1 - pt) ** GAMMA * t * jnp.log(pt)
        - WN * pt ** GAMMA * (1 - t) * jnp.log(1 - pt)
    )
    return jnp.mean(loss)


if __name__ == "__main__":
    key = jax.random.PRNGKey(0)
    k1, k2 = jax.random.split(key)

    # NCHW-like probability input, clipped away from 0/1 for finite log().
    shape = (2, 4, 16, 16)
    x = jax.random.uniform(k1, shape, jnp.float32, minval=0.05, maxval=0.95)
    target = (jax.random.uniform(k2, shape, jnp.float32) > 0.5).astype(jnp.float32)

    out = weighted_focal_loss(x, target)
    out = jax.block_until_ready(out)

    ref = _reference(x, target)
    assert jnp.allclose(out, ref, rtol=1e-5, atol=1e-6), (out, ref)

    print("KERNEL_OK")
</pallas_src>

<mosaic_0001>
module attributes {stable_mosaic.version = 11 : i64} {
  func.func @_focal_loss_kernel(%arg0: i32, %arg1: memref<16x128xf32, #tpu.memory_space<vmem>>, %arg2: memref<16x128xf32, #tpu.memory_space<vmem>>, %arg3: memref<8x128xf32, #tpu.memory_space<vmem>>) attributes {dimension_semantics = [#tpu.dimension_semantics<parallel>], iteration_bounds = array<i64: 1>, scalar_prefetch = 0 : i64, scratch_operands = 0 : i64, tpu.core_type = #tpu.core_type<tc>, window_params = [{transform_indices = @transform_0, window_bounds = array<i64: 16, 128>}, {transform_indices = @transform_1, window_bounds = array<i64: 16, 128>}, {transform_indices = @transform_2, window_bounds = array<i64: 8, 128>}]} {
    %c0 = arith.constant 0 : index
    %c0_0 = arith.constant 0 : index
    %0 = vector.load %arg1[%c0, %c0_0] : memref<16x128xf32, #tpu.memory_space<vmem>>, vector<16x128xf32>
    %c0_1 = arith.constant 0 : index
    %c0_2 = arith.constant 0 : index
    %1 = vector.load %arg2[%c0_1, %c0_2] : memref<16x128xf32, #tpu.memory_space<vmem>>, vector<16x128xf32>
    %cst = arith.constant 0.000000e+00 : f32
    %cst_3 = arith.constant 0.425287366 : f32
    %2 = arith.subf %cst, %cst_3 : f32
    %cst_4 = arith.constant 1.000000e+00 : f32
    %3 = vector.broadcast %cst_4 : f32 to vector<16x128xf32>
    %4 = arith.subf %3, %0 : vector<16x128xf32>
    %5 = arith.mulf %4, %4 : vector<16x128xf32>
    %6 = vector.broadcast %2 : f32 to vector<16x128xf32>
    %7 = arith.mulf %6, %5 : vector<16x128xf32>
    %8 = arith.mulf %7, %1 : vector<16x128xf32>
    %9 = math.log %0 : vector<16x128xf32>
    %10 = arith.mulf %8, %9 : vector<16x128xf32>
    %11 = arith.mulf %0, %0 : vector<16x128xf32>
    %cst_5 = arith.constant 0.574712634 : f32
    %12 = vector.broadcast %cst_5 : f32 to vector<16x128xf32>
    %13 = arith.mulf %12, %11 : vector<16x128xf32>
    %cst_6 = arith.constant 1.000000e+00 : f32
    %14 = vector.broadcast %cst_6 : f32 to vector<16x128xf32>
    %15 = arith.subf %14, %1 : vector<16x128xf32>
    %16 = arith.mulf %13, %15 : vector<16x128xf32>
    %cst_7 = arith.constant 1.000000e+00 : f32
    %17 = vector.broadcast %cst_7 : f32 to vector<16x128xf32>
    %18 = arith.subf %17, %0 : vector<16x128xf32>
    %19 = math.log %18 : vector<16x128xf32>
    %20 = arith.mulf %16, %19 : vector<16x128xf32>
    %21 = arith.subf %10, %20 : vector<16x128xf32>
    %22 = vector.shape_cast %21 : vector<16x128xf32> to vector<2x8x128xf32>
    %cst_8 = arith.constant dense<0.000000e+00> : vector<8x128xf32>
    %23 = vector.multi_reduction <add>, %22, %cst_8 [0] : vector<2x8x128xf32> to vector<8x128xf32>
    %c0_9 = arith.constant 0 : index
    %c0_10 = arith.constant 0 : index
    %24 = vector.load %arg3[%c0_9, %c0_10] : memref<8x128xf32, #tpu.memory_space<vmem>>, vector<8x128xf32>
    tpu.vector_store %arg3[%c0_9, %c0_10], %23 {strides = array<i32>} : memref<8x128xf32, #tpu.memory_space<vmem>>, vector<8x128xf32>,
    return
  }
  func.func @transform_0(%arg0: i32) -> (i32, i32) {
    %c0_i32 = arith.constant 0 : i32
    %c0_i32_0 = arith.constant 0 : i32
    return %arg0, %c0_i32 : i32, i32
  }
  func.func @transform_1(%arg0: i32) -> (i32, i32) {
    %c0_i32 = arith.constant 0 : i32
    %c0_i32_0 = arith.constant 0 : i32
    return %arg0, %c0_i32 : i32, i32
  }
  func.func @transform_2(%arg0: i32) -> (i32, i32) {
    %c0_i32 = arith.constant 0 : i32
    %c0_i32_0 = arith.constant 0 : i32
    return %arg0, %c0_i32 : i32, i32
  }
}

</mosaic_0001>

<llo_original>
// kernel: tpu_custom_call.1
$region0: #{tpu_custom_call.1}
  #allocation0 [shape = 'u32[]', space=smem, size = 0x4, offset = 0x4, fixed_abs, tag = 'smem constant byte address 0x4 - core index']
  #allocation1 [shape = 'u32[144,128]{1,0:T(1,128)}', space=vmem, size = 0x12000, scoped, tag = 'internal scratch']
  %s0 = inlined_call_operand.hbm [shape: f32[16,128], index: 0, kind: input, shape index: {}]
  %s1 = inlined_call_operand.hbm [shape: f32[16,128], index: 1, kind: input, shape index: {}]
  %s2 = inlined_call_operand.hbm [shape: f32[8,128], index: 2, kind: output, shape index: {}]
  %s3 = sld [smem:[#allocation0]]
  $region26: #{tpu_custom_call.1} parent=0
    _
  %s5 = ssub.s32 1, %s3
  %s6 = scalar_select 0, %s5, %s3
  $region1: #{tpu_custom_call.1} parent=0
    #allocation2 [shape = 'u8[8192]{0}', space=vmem, size = 0x2000, scoped, tag = 'input window, operand 0, single buffered']
    #allocation3 [shape = 's32[1]{0}', space=sflag, size = 0x4, scoped, tag = 'scoped memory for tpu_custom_call.1']
    #allocation4 [shape = 's32[1]{0}', space=sflag, size = 0x4, scoped, tag = 'scoped memory for tpu_custom_call.1']
    #allocation5 [shape = 'u8[8192]{0}', space=vmem, size = 0x2000, scoped, tag = 'input window, operand 1, single buffered']
    #allocation6 [shape = 's32[1]{0}', space=sflag, size = 0x4, scoped, tag = 'scoped memory for tpu_custom_call.1']
    #allocation7 [shape = 'u8[4096]{0}', space=vmem, size = 0x1000, scoped, tag = 'output window, operand 0, single buffered']
    %7 = vsyncpa [#allocation3], 0
    %8 = vsyncpa [#allocation6], 0
    %9 = vsyncpa [#allocation4], 0
    // Predicated region
    $region2: #{tpu_custom_call.1} parent=1 // pred_check
      _
    $region3: #{tpu_custom_call.1} parent=1 // pred_check_branch
      %11 = sbr.rel (0) target = $region5
    $region4: #{tpu_custom_call.1} parent=1 // pred_region
      %s13 = ssub.s32 256, 256
      %14 = vsyncadd [#allocation3], %s13
      %s15 = sshll.u32 [#allocation2], 4
      %s16 = int_to_ptr.vmem [resolvable:$true] %s15
      %21 = dma.hbm_to_vmem [thread:$0]  %s0, 256, %s16, [#allocation3], 128, 128, 8
    $region5: #{tpu_custom_call.1} parent=1 // pred_fallthru
      _
    // Predicated region
    $region6: #{tpu_custom_call.1} parent=1 // pred_check
      _
    $region7: #{tpu_custom_call.1} parent=1 // pred_check_branch
      %23 = sbr.rel (0) target = $region9
    $region8: #{tpu_custom_call.1} parent=1 // pred_region
      %s25 = ssub.s32 256, 256
      %26 = vsyncadd [#allocation6], %s25
      %s27 = sshll.u32 [#allocation5], 4
      %s28 = int_to_ptr.vmem [resolvable:$true] %s27
      %33 = dma.hbm_to_vmem [thread:$0]  %s1, 256, %s28, [#allocation6], 128, 128, 8
    $region9: #{tpu_custom_call.1} parent=1 // pred_fallthru
      _
    // Predicated region
    $region10: #{tpu_custom_call.1} parent=1 // pred_check
      _
    $region11: #{tpu_custom_call.1} parent=1 // pred_check_branch
      %35 = sbr.rel (0) target = $region13
    $region12: #{tpu_custom_call.1} parent=1 // pred_region
      %36 = dma.done [#allocation3], 256
    $region13: #{tpu_custom_call.1} parent=1 // pred_fallthru
      _
    // Predicated region
    $region14: #{tpu_custom_call.1} parent=1 // pred_check
      _
    $region15: #{tpu_custom_call.1} parent=1 // pred_check_branch
      %38 = sbr.rel (0) target = $region17
    $region16: #{tpu_custom_call.1} parent=1 // pred_region
      %39 = dma.done [#allocation6], 256
    $region17: #{tpu_custom_call.1} parent=1 // pred_fallthru
      _
    %v40 = vld [vmem:[#allocation2] sm:$0xff]
    %v41 = vld [vmem:[#allocation2 + $0x8] sm:$0xff]
    %v42 = vld [vmem:[#allocation5] sm:$0xff]
    %v43 = vld [vmem:[#allocation5 + $0x8] sm:$0xff]
    %v44 = vsub.f32 1.0, %v40
    %v45 = vsub.f32 1.0, %v41
    %v46 = vmul.f32 %v44, %v44
    %v47 = vmul.f32 %v45, %v45
    %v48 = vmul.f32 %v46, -0.42528737
    %v49 = vmul.f32 %v47, -0.42528737
    %v50 = vmul.f32 %v48, %v42
    %v51 = vmul.f32 %v49, %v43
    %v52 = vlog2.pop %v40
    %v53 = vmul.f32 %v52, 0.6931472
    %v54 = vlog2.pop %v41
    %v55 = vmul.f32 %v54, 0.6931472
    %v56 = vmul.f32 %v50, %v53
    %v57 = vmul.f32 %v51, %v55
    %v58 = vmul.f32 %v40, %v40
    %v59 = vmul.f32 %v41, %v41
    %v60 = vmul.f32 %v58, 0.57471263
    %v61 = vmul.f32 %v59, 0.57471263
    %v62 = vsub.f32 1.0, %v42
    %v63 = vsub.f32 1.0, %v43
    %v64 = vmul.f32 %v60, %v62
    %v65 = vmul.f32 %v61, %v63
    %v66 = vlog2.pop %v44
    %v67 = vmul.f32 %v66, 0.6931472
    %v68 = vlog2.pop %v45
    %v69 = vmul.f32 %v68, 0.6931472
    %v70 = vmul.f32 %v64, %v67
    %v71 = vmul.f32 %v65, %v69
    %v72 = vsub.f32 %v56, %v70
    %v73 = vsub.f32 %v57, %v71
    %v74 = vadd.f32 %v72, %v73
    %75 = vst [vmem:[#allocation7] sm:$0xff] %v74
    // Predicated region
    $region18: #{tpu_custom_call.1} parent=1 // pred_check
      _
    $region19: #{tpu_custom_call.1} parent=1 // pred_check_branch
      %77 = sbr.rel (0) target = $region21
    $region20: #{tpu_custom_call.1} parent=1 // pred_region
      %s79 = ssub.s32 128, 128
      %80 = vsyncadd [#allocation4], %s79
      %s82 = sshll.u32 [#allocation7], 4
      %s83 = int_to_ptr.vmem [resolvable:$true] %s82
      %85 = dma.vmem_to_hbm [thread:$0]  %s83, 128, %s2, [#allocation4]
    $region21: #{tpu_custom_call.1} parent=1 // pred_fallthru
      _
    // Predicated region
    $region22: #{tpu_custom_call.1} parent=1 // pred_check
      _
    $region23: #{tpu_custom_call.1} parent=1 // pred_check_branch
      %87 = sbr.rel (0) target = $region25
    $region24: #{tpu_custom_call.1} parent=1 // pred_region
      %88 = dma.done [#allocation4], 128
    $region25: #{tpu_custom_call.1} parent=1 // pred_fallthru
      _
    %89 = vsyncpa [#allocation3], 1
    %90 = vsyncpa [#allocation6], 1
    %91 = vsyncpa [#allocation4], 1

</llo_original>
